<compile_context>
chip_gen: v7x
topology: tpu7x:2x2x1
jax: 0.10.0
libtpu: 0.0.40
codegen_flags: <defaults>
</compile_context>

<pallas_src>
import functools

import jax
import jax.numpy as jnp
from jax.experimental import pallas as pl
from jax.experimental.pallas import tpu as pltpu

_EPS = 1e-5


# ---------------------------------------------------------------------------
# Hardware / tiling helpers
# ---------------------------------------------------------------------------
def _vmem_budget():
    """Returns (scoped VMEM limit to request, planning budget) in bytes."""
    try:
        cap = int(pltpu.get_tpu_info().vmem_capacity_bytes)  # 128 MiB v5e/v6e, 64 MiB v7x
    except Exception:
        cap = 64 * 1024 * 1024  # conservative default
    limit = (cap * 3) // 4      # ~96 MiB on v5e/v6e, ~48 MiB on v7x
    return limit, limit - 4 * 1024 * 1024


def _round_up(n, m):
    return ((n + m - 1) // m) * m


def _feature_tiles(d):
    """Sublane (BN-feature) tile candidates: d itself and multiples of 8 dividing d."""
    cands = {d}
    cands.update(t for t in range(8, d, 8) if d % t == 0)
    return sorted(cands, reverse=True)


def _lane_tiles(m):
    """Lane tile candidates (descending): multiples of 128 dividing m (m % 128 == 0)."""
    q = m // 128
    return [128 * k for k in range(q, 0, -1) if q % k == 0]


# ---------------------------------------------------------------------------
# Kernel 1a: single-pass Linear + BatchNorm1d(train) + ReLU (full R resident).
#   x_ref : [D, Rp]  BN features on sublanes, fused + zero-padded reduce axes
#                    on lanes (Rp is a multiple of 128)
#   w_ref : [dt, D]  PyTorch Linear weight layout (out, in)
#   b/g/bt: [dt, 1]  Linear bias, BN gamma, BN beta
# ---------------------------------------------------------------------------
def _fc_bn_relu_kernel(x_ref, w_ref, b_ref, g_ref, bt_ref, o_ref, *,
                       r_true, n_pad, eps):
    x = x_ref[...]                                                   # [D, Rp]
    w = w_ref[...].astype(x.dtype)       # bf16 weights feed the MXU natively
    b = b_ref[...]                                                   # [dt, 1]
    y = jnp.dot(w, x, preferred_element_type=jnp.float32) + b        # [dt, Rp] f32

    # One resident sweep: sum and sum-of-squares together (no diff temp).
    s1 = jnp.sum(y, axis=-1, keepdims=True)
    s2 = jnp.sum(y * y, axis=-1, keepdims=True)
    if n_pad:  # zero-padded lanes contribute exactly `b` each before BN
        s1 = s1 - n_pad * b
        s2 = s2 - n_pad * (b * b)
    inv_r = 1.0 / r_true
    mean = s1 * inv_r
    var = s2 * inv_r - mean * mean                                   # f32 stats
    scale = g_ref[...] * jax.lax.rsqrt(var + eps)
    shift = bt_ref[...] - mean * scale
    o_ref[...] = jnp.maximum(y * scale + shift, 0.0).astype(o_ref.dtype)


# ---------------------------------------------------------------------------
# Kernel 1b/1c: two-pass variant for when the full [D, R] block does not fit
# VMEM (e.g. v7x 64 MiB with production DCUNet shapes).  Pass (b) accumulates
# per-feature sum / sum-of-squares over R tiles; scale/shift are formed from
# the tiny [2, D, 1] result in plain JAX; pass (c) re-reads x, redoes the
# (cheap, memory-bound) matmul and applies BN + ReLU.
# ---------------------------------------------------------------------------
def _fc_stats_kernel(x_ref, w_ref, b_ref, s1_ref, s2_ref):
    @pl.when(pl.program_id(1) == 0)
    def _init():
        s1_ref[...] = jnp.zeros_like(s1_ref)
        s2_ref[...] = jnp.zeros_like(s2_ref)

    x = x_ref[...]                                                   # [D, rt]
    w = w_ref[...].astype(x.dtype)                                   # [D, D]
    y = jnp.dot(w, x, preferred_element_type=jnp.float32) + b_ref[...]
    s1_ref[...] += jnp.sum(y, axis=-1, keepdims=True)
    s2_ref[...] += jnp.sum(y * y, axis=-1, keepdims=True)


def _fc_apply_kernel(x_ref, w_ref, b_ref, sc_ref, sh_ref, o_ref):
    x = x_ref[...]                                                   # [D, rt]
    w = w_ref[...].astype(x.dtype)                                   # [dt, D]
    y = jnp.dot(w, x, preferred_element_type=jnp.float32) + b_ref[...]
    o_ref[...] = jnp.maximum(y * sc_ref[...] + sh_ref[...], 0.0).astype(o_ref.dtype)


def _fc_bn_relu(x2, w, b, g, bt, *, r_true, eps, limit, budget,
                force_two_pass=False, r_tile=None):
    """x2: [2, D, Rp] (lane-padded); w: [2, D, D]; b/g/bt: [2, D] -> [2, D, Rp]."""
    parts, d, r_pad = x2.shape
    ab = x2.dtype.itemsize
    n_pad = r_pad - r_true
    w = w.astype(jnp.float32)
    col = lambda v: v.astype(jnp.float32).reshape(parts, d, 1)
    b3, g3, bt3 = col(b), col(g), col(bt)
    cparams = lambda sem: pltpu.CompilerParams(
        dimension_semantics=sem, vmem_limit_bytes=limit)

    # ----- single-pass: full-R residency, only if it fits the VMEM budget
    dt = None
    if not force_two_pass:
        for cand in _feature_tiles(d):
            need = (2 * d * r_pad * ab        # resident x block (double buffered)
                    + 2 * cand * r_pad * ab   # output block
                    + 2 * cand * d * 4        # weight block
                    + 3 * cand * r_pad * 4    # f32 temporaries (y and friends)
                    + (1 << 16))
            if need <= budget:
                dt = cand
                break
    if dt is not None:
        return pl.pallas_call(
            functools.partial(_fc_bn_relu_kernel,
                              r_true=r_true, n_pad=n_pad, eps=eps),
            out_shape=jax.ShapeDtypeStruct((parts, d, r_pad), x2.dtype),
            grid=(parts, d // dt),
            in_specs=[
                pl.BlockSpec((pl.Squeezed(), d, r_pad), lambda p, j: (p, 0, 0)),
                pl.BlockSpec((pl.Squeezed(), dt, d), lambda p, j: (p, j, 0)),
                pl.BlockSpec((pl.Squeezed(), dt, 1), lambda p, j: (p, j, 0)),
                pl.BlockSpec((pl.Squeezed(), dt, 1), lambda p, j: (p, j, 0)),
                pl.BlockSpec((pl.Squeezed(), dt, 1), lambda p, j: (p, j, 0)),
            ],
            out_specs=pl.BlockSpec((pl.Squeezed(), dt, r_pad),
                                   lambda p, j: (p, j, 0)),
            compiler_params=cparams(("parallel", "arbitrary")),
        )(x2, w, b3, g3, bt3)

    # ----- two-pass fallback: tile R, accumulate sum/sumsq, then normalize
    if r_tile is not None:
        rt = r_tile
    else:
        rt = 128
        for cand in _lane_tiles(r_pad):
            if (2 * d * cand * ab + 2 * d * d * 4 + 3 * d * cand * 4
                    + (1 << 16)) <= budget:
                rt = cand
                break
    assert r_pad % rt == 0, "R tile must divide the padded reduce axis"

    s1, s2 = pl.pallas_call(
        _fc_stats_kernel,
        out_shape=(jax.ShapeDtypeStruct((parts, d, 1), jnp.float32),
                   jax.ShapeDtypeStruct((parts, d, 1), jnp.float32)),
        grid=(parts, r_pad // rt),
        in_specs=[
            pl.BlockSpec((pl.Squeezed(), d, rt), lambda p, k: (p, 0, k)),
            pl.BlockSpec((pl.Squeezed(), d, d), lambda p, k: (p, 0, 0)),
            pl.BlockSpec((pl.Squeezed(), d, 1), lambda p, k: (p, 0, 0)),
        ],
        out_specs=[
            pl.BlockSpec((pl.Squeezed(), d, 1), lambda p, k: (p, 0, 0)),
            pl.BlockSpec((pl.Squeezed(), d, 1), lambda p, k: (p, 0, 0)),
        ],
        compiler_params=cparams(("parallel", "arbitrary")),
    )(x2, w, b3)

    # Tiny [2, D, 1] math in plain JAX; padded lanes contributed exactly `b`.
    if n_pad:
        s1 = s1 - n_pad * b3
        s2 = s2 - n_pad * (b3 * b3)
    mean = s1 / r_true
    var = s2 / r_true - mean * mean
    scale = g3 * jax.lax.rsqrt(var + eps)
    shift = bt3 - mean * scale

    tiles = _feature_tiles(d)
    dt = tiles[-1]
    for cand in tiles:
        need = (2 * d * rt * ab + 2 * cand * rt * ab + 2 * cand * d * 4
                + 3 * cand * rt * 4 + (1 << 16))
        if need <= budget:
            dt = cand
            break

    return pl.pallas_call(
        _fc_apply_kernel,
        out_shape=jax.ShapeDtypeStruct((parts, d, r_pad), x2.dtype),
        grid=(parts, d // dt, r_pad // rt),
        in_specs=[
            pl.BlockSpec((pl.Squeezed(), d, rt), lambda p, j, k: (p, 0, k)),
            pl.BlockSpec((pl.Squeezed(), dt, d), lambda p, j, k: (p, j, 0)),
            pl.BlockSpec((pl.Squeezed(), dt, 1), lambda p, j, k: (p, j, 0)),
            pl.BlockSpec((pl.Squeezed(), dt, 1), lambda p, j, k: (p, j, 0)),
            pl.BlockSpec((pl.Squeezed(), dt, 1), lambda p, j, k: (p, j, 0)),
        ],
        out_specs=pl.BlockSpec((pl.Squeezed(), dt, rt), lambda p, j, k: (p, j, k)),
        compiler_params=cparams(("parallel", "arbitrary", "arbitrary")),
    )(x2, w, b3, scale, shift)


# ---------------------------------------------------------------------------
# Kernel 2: (T_att + F_att + P) + per-part 1x1 Conv2d over channels.
# Parts x channels are packed onto the sublane axis ([2C(->mult of 8), M],
# block-diagonal weight), lanes = fused (B, F, T), tile from the VMEM budget.
# ---------------------------------------------------------------------------
def _combine_conv_kernel(t_ref, f_ref, x_ref, w_ref, b_ref, o_ref):
    comb = (t_ref[...].astype(jnp.float32)
            + f_ref[...].astype(jnp.float32)
            + x_ref[...].astype(jnp.float32))                        # [2Cp, mt]
    y = jnp.dot(w_ref[...], comb, preferred_element_type=jnp.float32)
    o_ref[...] = (y + b_ref[...]).astype(o_ref.dtype)


def _combine_conv(t2, f2, x2, w_pack, b_pack, out_dtype, *, limit, budget):
    """t2/f2/x2: [2Cp, Mp]; w_pack: [2Cp, 2Cp]; b_pack: [2Cp, 1] -> [2Cp, Mp]."""
    c2, m_pad = t2.shape
    ab = t2.dtype.itemsize
    per_lane = c2 * (6 * ab + 8 + 16)   # 3 ins x2 bufs + out x2 bufs + f32 temps
    mt = 128
    for cand in _lane_tiles(m_pad):
        if cand * per_lane + (1 << 16) <= budget:
            mt = cand
            break
    data_spec = lambda: pl.BlockSpec((c2, mt), lambda i: (0, i))
    return pl.pallas_call(
        _combine_conv_kernel,
        out_shape=jax.ShapeDtypeStruct((c2, m_pad), out_dtype),
        grid=(m_pad // mt,),
        in_specs=[
            data_spec(), data_spec(), data_spec(),
            pl.BlockSpec((c2, c2), lambda i: (0, 0)),
            pl.BlockSpec((c2, 1), lambda i: (0, 0)),
        ],
        out_specs=data_spec(),
        compiler_params=pltpu.CompilerParams(
            dimension_semantics=("parallel",), vmem_limit_bytes=limit),
    )(t2, f2, x2, w_pack, b_pack)


# ---------------------------------------------------------------------------
# SDAB forward.  x: [B, 2, C, F, T].  Params are stacked (re, im) pairs.
# ---------------------------------------------------------------------------
def sdab_forward(x, params, *, eps=_EPS, act_dtype=jnp.bfloat16,
                 force_two_pass_fc=False, fc_r_tile=None):
    B, parts, C, F, T = x.shape
    assert parts == 2, "dim 1 must be the complex (re/im) axis of size 2"
    act_dtype = jnp.dtype(act_dtype)
    limit, budget = _vmem_budget()

    fc = functools.partial(_fc_bn_relu, eps=eps, limit=limit, budget=budget,
                           force_two_pass=force_two_pass_fc, r_tile=fc_r_tile)

    def pad_lanes(a, m, m_pad):
        if m_pad == m:
            return a
        return jnp.pad(a, [(0, 0)] * (a.ndim - 1) + [(0, m_pad - m)])

    # ---- time-axis attention: BN features = frame T, stats over (B, C, F)
    r_t = B * C * F
    r_tp = _round_up(r_t, 128)
    x_time = jnp.transpose(x, (1, 4, 0, 2, 3)).reshape(2, T, r_t).astype(act_dtype)
    att_t = fc(pad_lanes(x_time, r_t, r_tp), params["w_time"], params["b_time"],
               params["g_time"], params["beta_time"], r_true=r_t)
    att_t = att_t[:, :, :r_t].reshape(2, T, B, C, F)
    att_t = jnp.transpose(att_t, (0, 3, 2, 4, 1))              # -> [2, C, B, F, T]

    # ---- freq-axis attention: BN features = frequency F, stats over (B, C, T)
    r_f = B * C * T
    r_fp = _round_up(r_f, 128)
    x_freq = jnp.transpose(x, (1, 3, 0, 2, 4)).reshape(2, F, r_f).astype(act_dtype)
    att_f = fc(pad_lanes(x_freq, r_f, r_fp), params["w_freq"], params["b_freq"],
               params["g_freq"], params["beta_freq"], r_true=r_f)
    att_f = att_f[:, :, :r_f].reshape(2, F, B, C, T)
    att_f = jnp.transpose(att_f, (0, 3, 2, 1, 4))              # -> [2, C, B, F, T]

    # ---- combine + per-part 1x1 conv; parts x channels packed on sublanes
    m = B * F * T
    m_pad = _round_up(m, 128)
    c2 = 2 * C
    c2p = _round_up(c2, 8)
    x_cm = jnp.transpose(x, (1, 2, 0, 3, 4)).astype(act_dtype)  # [2, C, B, F, T]

    def to_2d(a):  # [2, C, B, F, T] -> [2Cp, Mp]  (contiguous reshape + zero pad)
        return jnp.pad(a.reshape(c2, m), ((0, c2p - c2), (0, m_pad - m)))

    wc = params["w_conv"].astype(jnp.float32)
    w_pack = jnp.zeros((c2p, c2p), jnp.float32)
    w_pack = w_pack.at[:C, :C].set(wc[0]).at[C:c2, C:c2].set(wc[1])
    b_pack = jnp.zeros((c2p, 1), jnp.float32)
    b_pack = b_pack.at[:c2, 0].set(params["b_conv"].astype(jnp.float32).reshape(c2))

    out = _combine_conv(to_2d(att_t), to_2d(att_f), to_2d(x_cm),
                        w_pack, b_pack, x.dtype, limit=limit, budget=budget)
    out = out[:c2, :m].reshape(2, C, B, F, T)
    return jnp.transpose(out, (2, 0, 1, 3, 4))                 # -> [B, 2, C, F, T]


# ---------------------------------------------------------------------------
# Pure-JAX reference (mirrors the PyTorch module, training-mode BN).
# ---------------------------------------------------------------------------
def _sdab_module_ref(x4, w, b, g, bt, is_time, eps=_EPS):
    B, C, F, T = x4.shape
    hi = jax.lax.Precision.HIGHEST
    if is_time:
        xt = x4.reshape(B, C * F, T)
        y = jnp.einsum("bnt,ut->bnu", xt, w, precision=hi) + b        # [B, C*F, T]
        mean = jnp.mean(y, axis=(0, 1), keepdims=True)
        var = jnp.mean((y - mean) ** 2, axis=(0, 1), keepdims=True)
        y = (y - mean) / jnp.sqrt(var + eps) * g + bt
        return jnp.maximum(y, 0.0).reshape(B, C, F, T)
    else:
        xf = jnp.transpose(x4, (0, 2, 1, 3)).reshape(B, F, C * T)
        xf = jnp.transpose(xf, (0, 2, 1))                             # [B, C*T, F]
        y = jnp.einsum("bnf,uf->bnu", xf, w, precision=hi)            # [B, C*T, F]
        y = jnp.transpose(y + b, (0, 2, 1))                           # [B, F, C*T]
        mean = jnp.mean(y, axis=(0, 2), keepdims=True)
        var = jnp.mean((y - mean) ** 2, axis=(0, 2), keepdims=True)
        y = (y - mean) / jnp.sqrt(var + eps) * g.reshape(1, F, 1) + bt.reshape(1, F, 1)
        y = jnp.maximum(y, 0.0).reshape(B, F, C, T)
        return jnp.transpose(y, (0, 2, 1, 3))


def _sdab_ref(x, pr, eps=_EPS):
    hi = jax.lax.Precision.HIGHEST
    t_parts, f_parts = [], []
    for p in range(2):
        xp = x[:, p]
        t_parts.append(_sdab_module_ref(xp, pr["w_time"][p], pr["b_time"][p],
                                        pr["g_time"][p], pr["beta_time"][p], True, eps))
        f_parts.append(_sdab_module_ref(xp, pr["w_freq"][p], pr["b_freq"][p],
                                        pr["g_freq"][p], pr["beta_freq"][p], False, eps))
    comb = jnp.stack(t_parts, 1) + jnp.stack(f_parts, 1) + x
    outs = []
    for p in range(2):
        o = jnp.einsum("oc,bcft->boft", pr["w_conv"][p], comb[:, p], precision=hi)
        outs.append(o + pr["b_conv"][p].reshape(1, -1, 1, 1))
    return jnp.stack(outs, 1)


if __name__ == "__main__":
    # Keep test data exactly representable in bf16 so MXU precision-mode and
    # bf16-weight-cast differences cannot hide real bugs.
    def bf_exact(k, s, scale=1.0):
        v = scale * jax.random.normal(k, s, jnp.float32)
        return v.astype(jnp.bfloat16).astype(jnp.float32)

    def make_params(key, C, F, T):
        ks = jax.random.split(key, 10)
        return {
            "w_time": bf_exact(ks[0], (2, T, T), 0.25),
            "b_time": bf_exact(ks[1], (2, T), 0.1),
            "g_time": 1.0 + bf_exact(ks[2], (2, T), 0.1),
            "beta_time": bf_exact(ks[3], (2, T), 0.1),
            "w_freq": bf_exact(ks[4], (2, F, F), 0.25),
            "b_freq": bf_exact(ks[5], (2, F), 0.1),
            "g_freq": 1.0 + bf_exact(ks[6], (2, F), 0.1),
            "beta_freq": bf_exact(ks[7], (2, F), 0.1),
            "w_conv": bf_exact(ks[8], (2, C, C), 0.25),
            "b_conv": bf_exact(ks[9], (2, C), 0.1),
        }

    kx, kp, kx4, kxr, kpr = jax.random.split(jax.random.PRNGKey(0), 5)

    # Main config: batch=2, channel=4, frequency=16, frame=16.
    B, C, F, T = 2, 4, 16, 16
    x = bf_exact(kx, (B, 2, C, F, T))
    params = make_params(kp, C, F, T)
    ref = _sdab_ref(x, params)

    # 1) production path: bf16 activation storage between kernels.
    out = jax.block_until_ready(sdab_forward(x, params))
    assert out.shape == (B, 2, C, F, T)
    err = float(jnp.max(jnp.abs(out - ref)))
    assert err < 1.5e-1, f"bf16-activation path mismatch: max abs err = {err}"

    # 2) f32 activations: tight numerical check of the single-pass kernels.
    out32 = jax.block_until_ready(sdab_forward(x, params, act_dtype=jnp.float32))
    err32 = float(jnp.max(jnp.abs(out32 - ref)))
    assert err32 < 2e-2, f"f32-activation path mismatch: max abs err = {err32}"

    # 3) forced two-pass BN path (large-shape / v7x fallback), multiple R tiles.
    x4 = bf_exact(kx4, (4, 2, C, F, T))
    ref4 = _sdab_ref(x4, params)
    out_tp = jax.block_until_ready(
        sdab_forward(x4, params, act_dtype=jnp.float32,
                     force_two_pass_fc=True, fc_r_tile=128))
    err_tp = float(jnp.max(jnp.abs(out_tp - ref4)))
    assert err_tp < 2e-2, f"two-pass path mismatch: max abs err = {err_tp}"

    # 4) ragged shapes exercising the 128-lane padding / BN stat correction.
    Br, Cr, Fr, Tr = 2, 3, 12, 20
    xr = bf_exact(kxr, (Br, 2, Cr, Fr, Tr))
    params_r = make_params(kpr, Cr, Fr, Tr)
    ref_r = _sdab_ref(xr, params_r)
    out_r = jax.block_until_ready(sdab_forward(xr, params_r, act_dtype=jnp.float32))
    err_r = float(jnp.max(jnp.abs(out_r - ref_r)))
    assert err_r < 2e-2, f"ragged/padded path mismatch: max abs err = {err_r}"

    print("KERNEL_OK")
</pallas_src>

<mosaic_0001>
module attributes {stable_mosaic.version = 11 : i64} {
  func.func @_fc_bn_relu_kernel(%arg0: i32, %arg1: i32, %arg2: memref<1x16x128xbf16, #tpu.memory_space<vmem>>, %arg3: memref<1x16x16xf32, #tpu.memory_space<vmem>>, %arg4: memref<1x16x1xf32, #tpu.memory_space<vmem>>, %arg5: memref<1x16x1xf32, #tpu.memory_space<vmem>>, %arg6: memref<1x16x1xf32, #tpu.memory_space<vmem>>, %arg7: memref<1x16x128xbf16, #tpu.memory_space<vmem>>) attributes {dimension_semantics = [#tpu.dimension_semantics<parallel>, #tpu.dimension_semantics<arbitrary>], iteration_bounds = array<i64: 2, 1>, scalar_prefetch = 0 : i64, scratch_operands = 0 : i64, tpu.core_type = #tpu.core_type<tc>, window_params = [{transform_indices = @transform_0, window_bounds = array<i64: 1, 16, 128>}, {transform_indices = @transform_1, window_bounds = array<i64: 1, 16, 16>}, {transform_indices = @transform_2, window_bounds = array<i64: 1, 16, 1>}, {transform_indices = @transform_3, window_bounds = array<i64: 1, 16, 1>}, {transform_indices = @transform_4, window_bounds = array<i64: 1, 16, 1>}, {transform_indices = @transform_5, window_bounds = array<i64: 1, 16, 128>}]} {
    %c0 = arith.constant 0 : index
    %c0_0 = arith.constant 0 : index
    %c0_1 = arith.constant 0 : index
    %0 = vector.load %arg2[%c0, %c0_0, %c0_1] : memref<1x16x128xbf16, #tpu.memory_space<vmem>>, vector<1x16x128xbf16>
    %1 = vector.shape_cast %0 : vector<1x16x128xbf16> to vector<16x128xbf16>
    %c0_2 = arith.constant 0 : index
    %c0_3 = arith.constant 0 : index
    %c0_4 = arith.constant 0 : index
    %2 = vector.load %arg3[%c0_2, %c0_3, %c0_4] : memref<1x16x16xf32, #tpu.memory_space<vmem>>, vector<1x16x16xf32>
    %3 = vector.shape_cast %2 : vector<1x16x16xf32> to vector<16x16xf32>
    %4 = arith.truncf %3 : vector<16x16xf32> to vector<16x16xbf16>
    %c0_5 = arith.constant 0 : index
    %c0_6 = arith.constant 0 : index
    %c0_7 = arith.constant 0 : index
    %5 = vector.load %arg4[%c0_5, %c0_6, %c0_7] : memref<1x16x1xf32, #tpu.memory_space<vmem>>, vector<1x16x1xf32>
    %6 = vector.shape_cast %5 : vector<1x16x1xf32> to vector<16x1xf32>
    %cst = arith.constant dense<0.000000e+00> : vector<16x128xf32>
    %7 = tpu.matmul %4, %1, %cst {dimension_numbers = #tpu.dot_dimension_numbers<[1], [0], [0], [1], [0, 0, 1, 1], [], []>} : vector<16x16xbf16>, vector<16x128xbf16>, vector<16x128xf32> -> vector<16x128xf32>
    %8 = vector.broadcast %6 : vector<16x1xf32> to vector<16x128xf32>
    %9 = arith.addf %7, %8 : vector<16x128xf32>
    %cst_8 = arith.constant dense<0.000000e+00> : vector<16xf32>
    %10 = vector.multi_reduction <add>, %9, %cst_8 [1] : vector<16x128xf32> to vector<16xf32>
    %11 = vector.shape_cast %10 : vector<16xf32> to vector<16x1xf32>
    %12 = arith.mulf %9, %9 : vector<16x128xf32>
    %cst_9 = arith.constant dense<0.000000e+00> : vector<16xf32>
    %13 = vector.multi_reduction <add>, %12, %cst_9 [1] : vector<16x128xf32> to vector<16xf32>
    %14 = vector.shape_cast %13 : vector<16xf32> to vector<16x1xf32>
    %cst_10 = arith.constant 7.812500e-03 : f32
    %15 = vector.broadcast %cst_10 : f32 to vector<16x1xf32>
    %16 = arith.mulf %11, %15 : vector<16x1xf32>
    %cst_11 = arith.constant 7.812500e-03 : f32
    %17 = vector.broadcast %cst_11 : f32 to vector<16x1xf32>
    %18 = arith.mulf %14, %17 : vector<16x1xf32>
    %19 = arith.mulf %16, %16 : vector<16x1xf32>
    %20 = arith.subf %18, %19 : vector<16x1xf32>
    %c0_12 = arith.constant 0 : index
    %c0_13 = arith.constant 0 : index
    %c0_14 = arith.constant 0 : index
    %21 = vector.load %arg5[%c0_12, %c0_13, %c0_14] : memref<1x16x1xf32, #tpu.memory_space<vmem>>, vector<1x16x1xf32>
    %22 = vector.shape_cast %21 : vector<1x16x1xf32> to vector<16x1xf32>
    %cst_15 = arith.constant 9.99999974E-6 : f32
    %23 = vector.broadcast %cst_15 : f32 to vector<16x1xf32>
    %24 = arith.addf %20, %23 : vector<16x1xf32>
    %25 = math.rsqrt %24 : vector<16x1xf32>
    %26 = arith.mulf %22, %25 : vector<16x1xf32>
    %c0_16 = arith.constant 0 : index
    %c0_17 = arith.constant 0 : index
    %c0_18 = arith.constant 0 : index
    %27 = vector.load %arg6[%c0_16, %c0_17, %c0_18] : memref<1x16x1xf32, #tpu.memory_space<vmem>>, vector<1x16x1xf32>
    %28 = vector.shape_cast %27 : vector<1x16x1xf32> to vector<16x1xf32>
    %29 = arith.mulf %16, %26 : vector<16x1xf32>
    %30 = arith.subf %28, %29 : vector<16x1xf32>
    %31 = vector.broadcast %26 : vector<16x1xf32> to vector<16x128xf32>
    %32 = arith.mulf %9, %31 : vector<16x128xf32>
    %33 = vector.broadcast %30 : vector<16x1xf32> to vector<16x128xf32>
    %34 = arith.addf %32, %33 : vector<16x128xf32>
    %cst_19 = arith.constant 0.000000e+00 : f32
    %35 = vector.broadcast %cst_19 : f32 to vector<16x128xf32>
    %36 = arith.maximumf %34, %35 : vector<16x128xf32>
    %37 = arith.truncf %36 : vector<16x128xf32> to vector<16x128xbf16>
    %c0_20 = arith.constant 0 : index
    %c0_21 = arith.constant 0 : index
    %c0_22 = arith.constant 0 : index
    %38 = vector.load %arg7[%c0_20, %c0_21, %c0_22] : memref<1x16x128xbf16, #tpu.memory_space<vmem>>, vector<1x16x128xbf16>
    %39 = vector.shape_cast %38 : vector<1x16x128xbf16> to vector<16x128xbf16>
    %40 = vector.shape_cast %37 : vector<16x128xbf16> to vector<1x16x128xbf16>
    tpu.vector_store %arg7[%c0_20, %c0_21, %c0_22], %40 {strides = array<i32>} : memref<1x16x128xbf16, #tpu.memory_space<vmem>>, vector<1x16x128xbf16>,
    return
  }
  func.func @transform_0(%arg0: i32, %arg1: i32) -> (i32, i32, i32) {
    %c0_i32 = arith.constant 0 : i32
    %c0_i32_0 = arith.constant 0 : i32
    %c0_i32_1 = arith.constant 0 : i32
    return %arg0, %c0_i32, %c0_i32_0 : i32, i32, i32
  }
  func.func @transform_1(%arg0: i32, %arg1: i32) -> (i32, i32, i32) {
    %c0_i32 = arith.constant 0 : i32
    %c0_i32_0 = arith.constant 0 : i32
    return %arg0, %arg1, %c0_i32 : i32, i32, i32
  }
  func.func @transform_2(%arg0: i32, %arg1: i32) -> (i32, i32, i32) {
    %c0_i32 = arith.constant 0 : i32
    %c0_i32_0 = arith.constant 0 : i32
    return %arg0, %arg1, %c0_i32 : i32, i32, i32
  }
  func.func @transform_3(%arg0: i32, %arg1: i32) -> (i32, i32, i32) {
    %c0_i32 = arith.constant 0 : i32
    %c0_i32_0 = arith.constant 0 : i32
    return %arg0, %arg1, %c0_i32 : i32, i32, i32
  }
  func.func @transform_4(%arg0: i32, %arg1: i32) -> (i32, i32, i32) {
    %c0_i32 = arith.constant 0 : i32
    %c0_i32_0 = arith.constant 0 : i32
    return %arg0, %arg1, %c0_i32 : i32, i32, i32
  }
  func.func @transform_5(%arg0: i32, %arg1: i32) -> (i32, i32, i32) {
    %c0_i32 = arith.constant 0 : i32
    %c0_i32_0 = arith.constant 0 : i32
    return %arg0, %arg1, %c0_i32 : i32, i32, i32
  }
}

</mosaic_0001>

<llo_original>
// kernel: tpu_custom_call.1
$region0: #{tpu_custom_call.1}
  #allocation0 [shape = 'u32[]', space=smem, size = 0x4, offset = 0x4, fixed_abs, tag = 'smem constant byte address 0x4 - core index']
  #allocation1 [shape = 'u32[144,128]{1,0:T(1,128)}', space=vmem, size = 0x12000, scoped, tag = 'internal scratch']
  %s0 = inlined_call_operand.vmem [shape: bf16[2,16,128], index: 0, kind: input, shape index: {}]
  %s1 = inlined_call_operand.vmem [shape: f32[2,16,16], index: 1, kind: input, shape index: {}]
  %s2 = inlined_call_operand.vmem [shape: f32[2,16,1], index: 2, kind: input, shape index: {}]
  %s3 = inlined_call_operand.vmem [shape: f32[2,16,1], index: 3, kind: input, shape index: {}]
  %s4 = inlined_call_operand.vmem [shape: f32[2,16,1], index: 4, kind: input, shape index: {}]
  %s5 = inlined_call_operand.hbm [shape: bf16[2,16,128], index: 5, kind: output, shape index: {}]
  %s6 = sld [smem:[#allocation0]]
  $region53: #{tpu_custom_call.1} parent=0
    _
  %s8 = ssub.s32 1, %s6
  %s9 = scalar_select 0, %s8, %s6
  $region1: #{tpu_custom_call.1} parent=0
    #allocation2 [shape = 'u8[8192]{0}', space=vmem, size = 0x2000, scoped, tag = 'output window, operand 0']
    #allocation3 [shape = 's32[2]{0}', space=sflag, size = 0x8, scoped, tag = 'scoped memory for tpu_custom_call.1']
    %10 = vsyncpa [#allocation3], 0
    %s11 = scalar_lea.sflag [#allocation3], 1
    %12 = vsyncpa %s11, 0
    loop: start=0, step=1, limit=4
    $region2: #{tpu_custom_call.1} parent=1 // loop_pre_header
      _
    $region3: #{tpu_custom_call.1} parent=1 // loop_header
      %s14 = sphi 0, %s18
      %p15 = scmp.ge.s32.totalorder %s14, 4
      %s21 = sphi 0, %s33
      %s22 = sphi 0, %s29
      %s23 = sphi 0, %s21
      %s24 = sphi 0, %s22
      %s25 = sphi 0, %s23
      %s26 = sphi 0, %s24
      %s36 = sphi 0, %s38
      %s39 = sphi 0, %s36
      %s40 = sphi 0, %s39
      %s56 = sphi 0, %s40
      %s64 = sphi 0, %s66
      %s67 = sphi 0, %s64
      %s68 = sphi 0, %s67
      %s84 = sphi 0, %s68
      %s92 = sphi 0, %s94
      %s95 = sphi 0, %s92
      %s96 = sphi 0, %s95
      %s112 = sphi 0, %s96
      %s120 = sphi 0, %s122
      %s123 = sphi 0, %s120
      %s124 = sphi 0, %s123
      %s140 = sphi 0, %s124
      %s148 = sphi 0, %s150
      %s151 = sphi 0, %s148
      %s152 = sphi 0, %s151
      %s168 = sphi 0, %s152
      %s176 = sphi 0, %s178
      %s179 = sphi 0, %s176
      %s180 = sphi 0, %s179
      %s196 = sphi 0, %s180
    $region4: #{tpu_custom_call.1} parent=1 // loop_header_branch
      %17 = sbr.rel (%p15) target = $region8
    $region5: #{tpu_custom_call.1} parent=1 // loop_body
      %s19 = ssub.s32 %s14, 1
      %s20 = ssub.s32 %s14, 2
      %s27 = sadd.s32 1, %s22
      %p28 = scmp.ge.s32.totalorder %s27, 1
      %s29 = scalar_select %p28, 0, %s27
      %s30 = sadd.s32 1, %s21
      %s31 = scalar_select %p28, %s30, %s21
      %p32 = scmp.ge.s32.totalorder %s31, 2
      %s33 = scalar_select %p32, 0, %s31
      %s34 = ssub.s32 %s21, %s33
      %p35 = scmp.eq.s32.totalorder %s34, 0
      %s37 = sadd.s32 %s36, 1
      %s38 = scalar_select %p35, %s36, %s37
      %p41 = pneg %p35
      %p42 = scmp.eq.s32.totalorder %s14, 1
      %p43 = por %p41, %p42
      %p44 = scmp.ne.s32.totalorder %s36, %s39
      %p45 = scmp.eq.s32.totalorder %s14, 0
      %p46 = por %p44, %p45
      %p47 = scmp.ne.s32.totalorder %s36, %s39
      %p48 = scmp.eq.s32.totalorder %s19, 1
      %p49 = por %p47, %p48
      %p50 = scmp.ne.s32.totalorder %s39, %s40
      %p51 = scmp.eq.s32.totalorder %s19, 0
      %p52 = por %p50, %p51
      %p53 = scmp.ne.s32.totalorder %s39, %s40
      %p54 = scmp.eq.s32.totalorder %s20, 1
      %p55 = por %p53, %p54
      %p57 = scmp.ne.s32.totalorder %s40, %s56
      %p58 = scmp.eq.s32.totalorder %s20, 0
      %p59 = por %p57, %p58
      %s60 = ssub.s32 %s21, %s33
      %s61 = ssub.s32 %s22, %s29
      %s62 = sor.u32 %s60, %s61
      %p63 = scmp.eq.s32.totalorder %s62, 0
      %s65 = sadd.s32 %s64, 1
      %s66 = scalar_select %p63, %s64, %s65
      %p69 = pneg %p63
      %p70 = scmp.eq.s32.totalorder %s14, 1
      %p71 = por %p69, %p70
      %p72 = scmp.ne.s32.totalorder %s64, %s67
      %p73 = scmp.eq.s32.totalorder %s14, 0
      %p74 = por %p72, %p73
      %p75 = scmp.ne.s32.totalorder %s64, %s67
      %p76 = scmp.eq.s32.totalorder %s19, 1
      %p77 = por %p75, %p76
      %p78 = scmp.ne.s32.totalorder %s67, %s68
      %p79 = scmp.eq.s32.totalorder %s19, 0
      %p80 = por %p78, %p79
      %p81 = scmp.ne.s32.totalorder %s67, %s68
      %p82 = scmp.eq.s32.totalorder %s20, 1
      %p83 = por %p81, %p82
      %p85 = scmp.ne.s32.totalorder %s68, %s84
      %p86 = scmp.eq.s32.totalorder %s20, 0
      %p87 = por %p85, %p86
      %s88 = ssub.s32 %s21, %s33
      %s89 = ssub.s32 %s22, %s29
      %s90 = sor.u32 %s88, %s89
      %p91 = scmp.eq.s32.totalorder %s90, 0
      %s93 = sadd.s32 %s92, 1
      %s94 = scalar_select %p91, %s92, %s93
      %p97 = pneg %p91
      %p98 = scmp.eq.s32.totalorder %s14, 1
      %p99 = por %p97, %p98
      %p100 = scmp.ne.s32.totalorder %s92, %s95
      %p101 = scmp.eq.s32.totalorder %s14, 0
      %p102 = por %p100, %p101
      %p103 = scmp.ne.s32.totalorder %s92, %s95
      %p104 = scmp.eq.s32.totalorder %s19, 1
      %p105 = por %p103, %p104
      %p106 = scmp.ne.s32.totalorder %s95, %s96
      %p107 = scmp.eq.s32.totalorder %s19, 0
      %p108 = por %p106, %p107
      %p109 = scmp.ne.s32.totalorder %s95, %s96
      %p110 = scmp.eq.s32.totalorder %s20, 1
      %p111 = por %p109, %p110
      %p113 = scmp.ne.s32.totalorder %s96, %s112
      %p114 = scmp.eq.s32.totalorder %s20, 0
      %p115 = por %p113, %p114
      %s116 = ssub.s32 %s21, %s33
      %s117 = ssub.s32 %s22, %s29
      %s118 = sor.u32 %s116, %s117
      %p119 = scmp.eq.s32.totalorder %s118, 0
      %s121 = sadd.s32 %s120, 1
      %s122 = scalar_select %p119, %s120, %s121
      %p125 = pneg %p119
      %p126 = scmp.eq.s32.totalorder %s14, 1
      %p127 = por %p125, %p126
      %p128 = scmp.ne.s32.totalorder %s120, %s123
      %p129 = scmp.eq.s32.totalorder %s14, 0
      %p130 = por %p128, %p129
      %p131 = scmp.ne.s32.totalorder %s120, %s123
      %p132 = scmp.eq.s32.totalorder %s19, 1
      %p133 = por %p131, %p132
      %p134 = scmp.ne.s32.totalorder %s123, %s124
      %p135 = scmp.eq.s32.totalorder %s19, 0
      %p136 = por %p134, %p135
      %p137 = scmp.ne.s32.totalorder %s123, %s124
      %p138 = scmp.eq.s32.totalorder %s20, 1
      %p139 = por %p137, %p138
      %p141 = scmp.ne.s32.totalorder %s124, %s140
      %p142 = scmp.eq.s32.totalorder %s20, 0
      %p143 = por %p141, %p142
      %s144 = ssub.s32 %s21, %s33
      %s145 = ssub.s32 %s22, %s29
      %s146 = sor.u32 %s144, %s145
      %p147 = scmp.eq.s32.totalorder %s146, 0
      %s149 = sadd.s32 %s148, 1
      %s150 = scalar_select %p147, %s148, %s149
      %p153 = pneg %p147
      %p154 = scmp.eq.s32.totalorder %s14, 1
      %p155 = por %p153, %p154
      %p156 = scmp.ne.s32.totalorder %s148, %s151
      %p157 = scmp.eq.s32.totalorder %s14, 0
      %p158 = por %p156, %p157
      %p159 = scmp.ne.s32.totalorder %s148, %s151
      %p160 = scmp.eq.s32.totalorder %s19, 1
      %p161 = por %p159, %p160
      %p162 = scmp.ne.s32.totalorder %s151, %s152
      %p163 = scmp.eq.s32.totalorder %s19, 0
      %p164 = por %p162, %p163
      %p165 = scmp.ne.s32.totalorder %s151, %s152
      %p166 = scmp.eq.s32.totalorder %s20, 1
      %p167 = por %p165, %p166
      %p169 = scmp.ne.s32.totalorder %s152, %s168
      %p170 = scmp.eq.s32.totalorder %s20, 0
      %p171 = por %p169, %p170
      %s172 = ssub.s32 %s21, %s33
      %s173 = ssub.s32 %s22, %s29
      %s174 = sor.u32 %s172, %s173
      %p175 = scmp.eq.s32.totalorder %s174, 0
      %s177 = sadd.s32 %s176, 1
      %s178 = scalar_select %p175, %s176, %s177
      %p181 = pneg %p175
      %p182 = scmp.eq.s32.totalorder %s14, 1
      %p183 = por %p181, %p182
      %p184 = scmp.ne.s32.totalorder %s176, %s179
      %p185 = scmp.eq.s32.totalorder %s14, 0
      %p186 = por %p184, %p185
      %p187 = scmp.ne.s32.totalorder %s176, %s179
      %p188 = scmp.eq.s32.totalorder %s19, 1
      %p189 = por %p187, %p188
      %p190 = scmp.ne.s32.totalorder %s179, %s180
      %p191 = scmp.eq.s32.totalorder %s19, 0
      %p192 = por %p190, %p191
      %p193 = scmp.ne.s32.totalorder %s179, %s180
      %p194 = scmp.eq.s32.totalorder %s20, 1
      %p195 = por %p193, %p194
      %p197 = scmp.ne.s32.totalorder %s180, %s196
      %p198 = scmp.eq.s32.totalorder %s20, 0
      %p199 = por %p197, %p198
      %p200 = scmp.le.s32.totalorder 1, %s14
      %p201 = scmp.lt.s32.totalorder %s14, 3
      %p202 = pnand %p200, %p201
      %p203 = pneg %p202
      // Predicated region
      $region9: #{tpu_custom_call.1} parent=5 // pred_check
        _
      $region10: #{tpu_custom_call.1} parent=5 // pred_check_branch
        %205 = sbr.rel (%p202) target = $region12
      $region11: #{tpu_custom_call.1} parent=5 // pred_region
        %s206 = ssub.s32 %s14, 1
      $region12: #{tpu_custom_call.1} parent=5 // pred_fallthru
        _
      %p207 = scmp.lt.s32.totalorder %s14, 2
      // Predicated region
      $region13: #{tpu_custom_call.1} parent=5 // pred_check
        %p208 = pneg %p207
      $region14: #{tpu_custom_call.1} parent=5 // pred_check_branch
        %210 = sbr.rel (%p208) target = $region16
      $region15: #{tpu_custom_call.1} parent=5 // pred_region
        // Predicated region
        $region17: #{tpu_custom_call.1} parent=15 // pred_check
          %p211 = pneg %p46
        $region18: #{tpu_custom_call.1} parent=15 // pred_check_branch
          %213 = sbr.rel (%p211) target = $region20
        $region19: #{tpu_custom_call.1} parent=15 // pred_region
          %p214 = scmp.lt.s32.totalorder %s21, 1
          %s215 = scalar_select %p214, %s21, 1
          %s216 = smul.addr %s215, 2
          %s217 = smul.addr %s216, 4
          %s218 = scalar_lea.vmem %s0, %s217
        $region20: #{tpu_custom_call.1} parent=15 // pred_fallthru
          _
        // Predicated region
        $region21: #{tpu_custom_call.1} parent=15 // pred_check
          %p219 = pneg %p74
        $region22: #{tpu_custom_call.1} parent=15 // pred_check_branch
          %221 = sbr.rel (%p219) target = $region24
        $region23: #{tpu_custom_call.1} parent=15 // pred_region
          %s222 = smul.u32 2, %s22
          %p223 = scmp.lt.s32.totalorder %s21, 1
          %s224 = scalar_select %p223, %s21, 1
          %p225 = scmp.lt.s32.totalorder %s222, 1
          %s226 = scalar_select %p225, %s222, 1
          %s227 = smul.addr %s224, 2
          %s228 = sadd.s32 %s226, %s227
          %s229 = smul.addr %s228, 8
          %s230 = scalar_lea.vmem %s1, %s229
          %s231 = smul.u32 2, %s22
        $region24: #{tpu_custom_call.1} parent=15 // pred_fallthru
          _
        // Predicated region
        $region25: #{tpu_custom_call.1} parent=15 // pred_check
          %p232 = pneg %p102
        $region26: #{tpu_custom_call.1} parent=15 // pred_check_branch
          %234 = sbr.rel (%p232) target = $region28
        $region27: #{tpu_custom_call.1} parent=15 // pred_region
          %s235 = smul.u32 2, %s22
          %p236 = scmp.lt.s32.totalorder %s21, 1
          %s237 = scalar_select %p236, %s21, 1
          %p238 = scmp.lt.s32.totalorder %s235, 1
          %s239 = scalar_select %p238, %s235, 1
          %s240 = smul.addr %s237, 2
          %s241 = sadd.s32 %s239, %s240
          %s242 = smul.addr %s241, 8
          %s243 = scalar_lea.vmem %s2, %s242
          %s244 = smul.u32 2, %s22
        $region28: #{tpu_custom_call.1} parent=15 // pred_fallthru
          _
        // Predicated region
        $region29: #{tpu_custom_call.1} parent=15 // pred_check
          %p245 = pneg %p130
        $region30: #{tpu_custom_call.1} parent=15 // pred_check_branch
          %247 = sbr.rel (%p245) target = $region32
        $region31: #{tpu_custom_call.1} parent=15 // pred_region
          %s248 = smul.u32 2, %s22
          %p249 = scmp.lt.s32.totalorder %s21, 1
          %s250 = scalar_select %p249, %s21, 1
          %p251 = scmp.lt.s32.totalorder %s248, 1
          %s252 = scalar_select %p251, %s248, 1
          %s253 = smul.addr %s250, 2
          %s254 = sadd.s32 %s252, %s253
          %s255 = smul.addr %s254, 8
          %s256 = scalar_lea.vmem %s3, %s255
          %s257 = smul.u32 2, %s22
        $region32: #{tpu_custom_call.1} parent=15 // pred_fallthru
          _
        // Predicated region
        $region33: #{tpu_custom_call.1} parent=15 // pred_check
          %p258 = pneg %p158
        $region34: #{tpu_custom_call.1} parent=15 // pred_check_branch
          %260 = sbr.rel (%p258) target = $region36
        $region35: #{tpu_custom_call.1} parent=15 // pred_region
          %s261 = smul.u32 2, %s22
          %p262 = scmp.lt.s32.totalorder %s21, 1
          %s263 = scalar_select %p262, %s21, 1
          %p264 = scmp.lt.s32.totalorder %s261, 1
          %s265 = scalar_select %p264, %s261, 1
          %s266 = smul.addr %s263, 2
          %s267 = sadd.s32 %s265, %s266
          %s268 = smul.addr %s267, 8
          %s269 = scalar_lea.vmem %s4, %s268
          %s270 = smul.u32 2, %s22
        $region36: #{tpu_custom_call.1} parent=15 // pred_fallthru
          _
      $region16: #{tpu_custom_call.1} parent=5 // pred_fallthru
        _
      %p271 = scmp.le.s32.totalorder 1, %s14
      %p272 = scmp.lt.s32.totalorder %s14, 3
      %p273 = pnand %p271, %p272
      %p274 = pneg %p273
      // Predicated region
      $region37: #{tpu_custom_call.1} parent=5 // pred_check
        _
      $region38: #{tpu_custom_call.1} parent=5 // pred_check_branch
        %276 = sbr.rel (%p273) target = $region40
      $region39: #{tpu_custom_call.1} parent=5 // pred_region
        %s277 = ssub.s32 %s14, 1
        %p278 = scmp.lt.s32.totalorder %s23, 1
        %s279 = scalar_select %p278, %s23, 1
        %s280 = smul.addr %s279, 2
        %s281 = smul.addr %s280, 4
        %s282 = scalar_lea.vmem %s0, %s281
        %p283 = pneg %p52
        %p284 = pneg %p49
        %s285 = smul.u32 2, %s24
        %p286 = scmp.lt.s32.totalorder %s23, 1
        %s287 = scalar_select %p286, %s23, 1
        %p288 = scmp.lt.s32.totalorder %s285, 1
        %s289 = scalar_select %p288, %s285, 1
        %s290 = smul.addr %s287, 2
        %s291 = sadd.s32 %s289, %s290
        %s292 = smul.addr %s291, 8
        %s293 = scalar_lea.vmem %s1, %s292
        %p294 = pneg %p80
        %p295 = pneg %p77
        %s296 = smul.u32 2, %s24
        %p297 = scmp.lt.s32.totalorder %s23, 1
        %s298 = scalar_select %p297, %s23, 1
        %p299 = scmp.lt.s32.totalorder %s296, 1
        %s300 = scalar_select %p299, %s296, 1
        %s301 = smul.addr %s298, 2
        %s302 = sadd.s32 %s300, %s301
        %s303 = smul.addr %s302, 8
        %s304 = scalar_lea.vmem %s2, %s303
        %p305 = pneg %p108
        %p306 = pneg %p105
        %s307 = smul.u32 2, %s24
        %p308 = scmp.lt.s32.totalorder %s23, 1
        %s309 = scalar_select %p308, %s23, 1
        %p310 = scmp.lt.s32.totalorder %s307, 1
        %s311 = scalar_select %p310, %s307, 1
        %s312 = smul.addr %s309, 2
        %s313 = sadd.s32 %s311, %s312
        %s314 = smul.addr %s313, 8
        %s315 = scalar_lea.vmem %s3, %s314
        %p316 = pneg %p136
        %p317 = pneg %p133
        %s318 = smul.u32 2, %s24
        %p319 = scmp.lt.s32.totalorder %s23, 1
        %s320 = scalar_select %p319, %s23, 1
        %p321 = scmp.lt.s32.totalorder %s318, 1
        %s322 = scalar_select %p321, %s318, 1
        %s323 = smul.addr %s320, 2
        %s324 = sadd.s32 %s322, %s323
        %s325 = smul.addr %s324, 8
        %s326 = scalar_lea.vmem %s4, %s325
        %p327 = pneg %p164
        %p328 = pneg %p161
        %p329 = pneg %p192
        %p330 = pneg %p189
        %s331 = sand.u32 %s179, 1
        %s332 = scalar_lea.sflag [#allocation3], %s331
        %s333 = sand.u32 %s179, 1
        %s334 = smul.addr %s333, 8
        %s335 = scalar_lea.vmem [#allocation2], %s334
        %p336 = scmp.lt.s32.totalorder %s23, 1
        %s337 = scalar_select %p336, %s23, 1
        %s338 = smul.addr %s337, 2
        %s339 = smul.addr %s338, 4
        %s340 = scalar_lea.vmem %s0, %s339
        %s341 = smul.u32 2, %s24
        %p342 = scmp.lt.s32.totalorder %s23, 1
        %s343 = scalar_select %p342, %s23, 1
        %p344 = scmp.lt.s32.totalorder %s341, 1
        %s345 = scalar_select %p344, %s341, 1
        %s346 = smul.addr %s343, 2
        %s347 = sadd.s32 %s345, %s346
        %s348 = smul.addr %s347, 8
        %s349 = scalar_lea.vmem %s1, %s348
        %s350 = smul.u32 2, %s24
        %s351 = smul.u32 2, %s24
        %p352 = scmp.lt.s32.totalorder %s23, 1
        %s353 = scalar_select %p352, %s23, 1
        %p354 = scmp.lt.s32.totalorder %s351, 1
        %s355 = scalar_select %p354, %s351, 1
        %s356 = smul.addr %s353, 2
        %s357 = sadd.s32 %s355, %s356
        %s358 = smul.addr %s357, 8
        %s359 = scalar_lea.vmem %s2, %s358
        %s360 = smul.u32 2, %s24
        %s361 = smul.u32 2, %s24
        %p362 = scmp.lt.s32.totalorder %s23, 1
        %s363 = scalar_select %p362, %s23, 1
        %p364 = scmp.lt.s32.totalorder %s361, 1
        %s365 = scalar_select %p364, %s361, 1
        %s366 = smul.addr %s363, 2
        %s367 = sadd.s32 %s365, %s366
        %s368 = smul.addr %s367, 8
        %s369 = scalar_lea.vmem %s3, %s368
        %s370 = smul.u32 2, %s24
        %s371 = smul.u32 2, %s24
        %p372 = scmp.lt.s32.totalorder %s23, 1
        %s373 = scalar_select %p372, %s23, 1
        %p374 = scmp.lt.s32.totalorder %s371, 1
        %s375 = scalar_select %p374, %s371, 1
        %s376 = smul.addr %s373, 2
        %s377 = sadd.s32 %s375, %s376
        %s378 = smul.addr %s377, 8
        %s379 = scalar_lea.vmem %s4, %s378
        %s380 = smul.u32 2, %s24
        %s381 = smul.u32 2, %s24
        %v383 = vld [vmem:[%s340] sm:$0xf]
        %v384 = vld [vmem:[%s340 + $0x4] sm:$0xf]
        %v385 = vld [vmem:[%s349] sm:$0xff]
        %v386 = vld [vmem:[%s349 + $0x8] sm:$0xff]
        %v387 = vpack.c.bf16 %v386, %v385
        %v388 = vld [vmem:[%s359] sm:$0xff]
        %v389 = vld [vmem:[%s359 + $0x8] sm:$0xff]
        %391 = vset.pattern.permute.xlu0 0
        %392 = vperm.xlu0 %391, %v388
        %v393 = vpop.permute.xlu0 %392
        %396 = vset.pattern.permute.xlu0 0
        %397 = vperm.xlu0 %396, %v389
        %v398 = vpop.permute.xlu0 %397
        %v402 = vunpack.c.l.b16 %v383
        %v403 = vunpack.c.l.b16 %v384
        %v404 = vpack.c.b16 %v403, %v402
        %vm406 = vcmask 130048
        %v408 = vsel %vm406, %v387, 0
        %410 = vmatprep.subr.bf16.mxu0 0
        %411 = vmatpush1.bf16.msra.mxu0 %v404
        %412 = vmatprep.subr.bf16.mxu0 0
        %413 = vmatpush1.bf16.msra.mxu0 0
        %414 = vmatprep.subr.bf16.mxu0 0
        %415 = vmatpush1.bf16.msra.mxu0 0
        %416 = vmatprep.subr.bf16.mxu0 0
        %417 = vmatpush1.bf16.msra.mxu0 0
        %418 = vmatprep.subr.bf16.mxu0 0
        %419 = vmatpush1.bf16.msra.mxu0 0
        %420 = vmatprep.subr.bf16.mxu0 0
        %421 = vmatpush1.bf16.msra.mxu0 0
        %422 = vmatprep.subr.bf16.mxu0 0
        %423 = vmatpush1.bf16.msra.mxu0 0
        %424 = vmatprep.subr.bf16.mxu0 0
        %425 = vmatpush1.bf16.msra.mxu0 0
        %426 = vmatprep.subr.bf16.mxu0 0
        %427 = vmatpush1.bf16.msra.mxu0 0
        %428 = vmatprep.subr.bf16.mxu0 0
        %429 = vmatpush1.bf16.msra.mxu0 0
        %430 = vmatprep.subr.bf16.mxu0 0
        %431 = vmatpush1.bf16.msra.mxu0 0
        %432 = vmatprep.subr.bf16.mxu0 0
        %433 = vmatpush1.bf16.msra.mxu0 0
        %434 = vmatprep.subr.bf16.mxu0 0
        %435 = vmatpush1.bf16.msra.mxu0 0
        %436 = vmatprep.subr.bf16.mxu0 0
        %437 = vmatpush1.bf16.msra.mxu0 0
        %438 = vmatprep.subr.bf16.mxu0 0
        %439 = vmatpush1.bf16.msra.mxu0 0
        %440 = vmatprep.subr.bf16.mxu0 0
        %441 = vmatpush1.bf16.msra.mxu0 0
        %442 = vmatprep.mubr.bf16.mxu0 0
        %443 = vmatmul.mubr.bf16.gmra.mrb[0].mxu0 %v408
        %v444 = vpop.f32.mrb[0].mxu0
        %v445 = vadd.f32 %v393, %v444
        %v446 = vpop.f32.mrb[0].mxu0
        %v447 = vpop.f32.mrb[0].mxu0
        %v448 = vadd.f32 %v398, %v447
        %v449 = vpop.f32.mrb[0].mxu0
        %450 = vdwg.mxu0
        %451 = vadd.xlane.f32.xlu0 %v445
        %v452 = vpop.xlane.xlu0 %451
        %453 = vadd.xlane.f32.xlu0 %v448
        %v454 = vpop.xlane.xlu0 %453
        %v455 = vmul.f32 %v445, %v445
        %v456 = vmul.f32 %v448, %v448
        %457 = vadd.xlane.f32.xlu0 %v455
        %v458 = vpop.xlane.xlu0 %457
        %459 = vadd.xlane.f32.xlu0 %v456
        %v460 = vpop.xlane.xlu0 %459
        %v461 = vmul.f32 %v452, 0.0078125
        %v462 = vmul.f32 %v454, 0.0078125
        %v463 = vmul.f32 %v458, 0.0078125
        %v464 = vmul.f32 %v460, 0.0078125
        %v465 = vmul.f32 %v461, %v461
        %v466 = vmul.f32 %v462, %v462
        %v467 = vsub.f32 %v463, %v465
        %v468 = vsub.f32 %v464, %v466
        %v469 = vld [vmem:[%s369] sm:$0xff]
        %v470 = vld [vmem:[%s369 + $0x8] sm:$0xff]
        %v471 = vadd.f32 %v467, 1e-05
        %v472 = vadd.f32 %v468, 1e-05
        %v473 = vrsqrt.pop %v471
        %v474 = vrsqrt.pop %v472
        %v475 = vmul.f32 %v469, %v473
        %v476 = vmul.f32 %v470, %v474
        %v477 = vld [vmem:[%s379] sm:$0xff]
        %v478 = vld [vmem:[%s379 + $0x8] sm:$0xff]
        %v479 = vmul.f32 %v461, %v475
        %v480 = vmul.f32 %v462, %v476
        %v481 = vsub.f32 %v477, %v479
        %v482 = vsub.f32 %v478, %v480
        %484 = vset.pattern.permute.xlu0 0
        %485 = vperm.xlu0 %484, %v475
        %v486 = vpop.permute.xlu0 %485
        %489 = vset.pattern.permute.xlu0 0
        %490 = vperm.xlu0 %489, %v476
        %v491 = vpop.permute.xlu0 %490
        %v493 = vmul.f32 %v445, %v486
        %v494 = vmul.f32 %v448, %v491
        %496 = vset.pattern.permute.xlu0 0
        %497 = vperm.xlu0 %496, %v481
        %v498 = vpop.permute.xlu0 %497
        %501 = vset.pattern.permute.xlu0 0
        %502 = vperm.xlu0 %501, %v482
        %v503 = vpop.permute.xlu0 %502
        %v505 = vadd.f32 %v493, %v498
        %v506 = vadd.f32 %v494, %v503
        %v507 = vmax.f32 %v505, 0.0
        %v508 = vmax.f32 %v506, 0.0
        %v509 = vpack.c.bf16 %v508, %v507
        %v511 = vunpack.c.l.b16 %v509
        %v512 = vunpack.c.h.b16 %v509
        %v513 = vpack.c.b16 %v511, %v511
        %v514 = vpack.c.b16 %v512, %v512
        %517 = vst [vmem:[%s335] sm:$0xf] %v513
        %518 = vst [vmem:[%s335 + $0x4] sm:$0xf] %v514
        %s519 = sand.u32 %s179, 1
        %s520 = scalar_lea.sflag [#allocation3], %s519
        %s521 = sand.u32 %s179, 1
        %s522 = smul.addr %s521, 8
        %s523 = scalar_lea.vmem [#allocation2], %s522
        // Predicated region
        $region41: #{tpu_custom_call.1} parent=39 // pred_check
          %p524 = pneg %p189
        $region42: #{tpu_custom_call.1} parent=39 // pred_check_branch
          %526 = sbr.rel (%p524) target = $region44
        $region43: #{tpu_custom_call.1} parent=39 // pred_region
          %s527 = smul.u32 2, %s24
          %s529 = ssub.s32 128, 128
          %530 = vsyncadd %s520, %s529
          %s531 = smul.addr %s23, 2
          %s532 = sadd.s32 %s527, %s531
          %s533 = smul.addr %s532, 64
          %s534 = scalar_lea.hbm %s5, %s533
          %s535 = sshll.u32 %s523, 4
          %s536 = int_to_ptr.vmem [resolvable:$true] %s535
          %541 = dma.vmem_to_hbm [thread:$0]  %s536, 128, %s534, %s520, 64, 64, 4
        $region44: #{tpu_custom_call.1} parent=39 // pred_fallthru
          _
      $region40: #{tpu_custom_call.1} parent=5 // pred_fallthru
        _
      %p542 = scmp.le.s32.totalorder 2, %s14
      // Predicated region
      $region45: #{tpu_custom_call.1} parent=5 // pred_check
        %p543 = pneg %p542
      $region46: #{tpu_custom_call.1} parent=5 // pred_check_branch
        %545 = sbr.rel (%p543) target = $region48
      $region47: #{tpu_custom_call.1} parent=5 // pred_region
        %s546 = ssub.s32 %s14, 2
        // Predicated region
        $region49: #{tpu_custom_call.1} parent=47 // pred_check
          %p547 = pneg %p195
        $region50: #{tpu_custom_call.1} parent=47 // pred_check_branch
          %549 = sbr.rel (%p547) target = $region52
        $region51: #{tpu_custom_call.1} parent=47 // pred_region
          %s550 = sand.u32 %s180, 1
          %s551 = scalar_lea.sflag [#allocation3], %s550
          %s552 = sand.u32 %s180, 1
          %s553 = smul.addr %s552, 8
          %s554 = scalar_lea.vmem [#allocation2], %s553
          %555 = dma.done %s551, 128
        $region52: #{tpu_custom_call.1} parent=47 // pred_fallthru
          _
      $region48: #{tpu_custom_call.1} parent=5 // pred_fallthru
        _
    $region6: #{tpu_custom_call.1} parent=1 // loop_footer
      %s18 = sadd.s32 1, %s14
    $region7: #{tpu_custom_call.1} parent=1 // loop_footer_branch
      %13 = sbr.rel target = $region3
    $region8: #{tpu_custom_call.1} parent=1 // loop_exit
      _
    %556 = vsyncpa [#allocation3], 1
    %s557 = scalar_lea.sflag [#allocation3], 1
    %558 = vsyncpa %s557, 1

</llo_original>
